<compile_context>
chip_gen: v7x
topology: tpu7x:2x2x1
jax: 0.10.0
libtpu: 0.0.40
codegen_flags: <defaults>
</compile_context>

<pallas_src>
import numpy as np
import jax
import jax.numpy as jnp
from jax import lax
from jax.experimental import pallas as pl
from jax.experimental.pallas import tpu as pltpu

# ---------------- configuration (small, consistent with the module) ---------
DIM = 32                 # dim (input channels C)
H = W = 8                # input_resolution
B = 2
L = H * W                # tokens in
M = B * L                # batch folded into the matmul M dimension
C_EXP = 2 * DIM          # channels after expand
C_OUT = DIM // 2         # output channels (= C_EXP // 4), LayerNorm width
HALF = 2 * C_OUT         # p1-half of the expanded channels
EPS = 1e-5               # torch LayerNorm default

# Block-diagonal per-group averaging matrix (trace-time constant, exact).
_AVG = np.kron(np.eye(C_EXP // C_OUT, dtype=np.float32),
               np.full((C_OUT, C_OUT), 1.0 / C_OUT, dtype=np.float32))


# ---------------- Pallas kernel ----------------------------------------------
def patch_expand_kernel(x_ref, w_ref, avg_ref, g_ref, b_ref, out_ref):
    """Single grid step over the whole (folded-batch) problem.

    x_ref  : (M, DIM)         bf16, all batch tokens
    w_ref  : (DIM, C_EXP)     bf16, expand weight (torch weight.T), no bias
    avg_ref: (C_EXP, C_EXP)   f32, block-diagonal group-averaging matrix
    g_ref  : (1, C_EXP)       LayerNorm gamma tiled over the 4 channel groups
    b_ref  : (1, C_EXP)       LayerNorm beta  tiled over the 4 channel groups
    out_ref: (B*H, 2*W, HALF) rows (b*H+h); cols split [0:W]=p1=0, [W:2W]=p1=1.
                              Row-major-reshapes for free to (B, 4*H*W, C_OUT).
    """
    # expand: one full-size bf16 matmul on the MXU, f32 accumulation
    y = jnp.dot(x_ref[...], w_ref[...],
                preferred_element_type=jnp.float32)            # (M, C_EXP) f32

    # Grouped LayerNorm (each C_OUT-wide channel group == one output token's
    # channel vector).  Stats via two independent MXU matmuls against the
    # constant block-diagonal averaging matrix: no lane-dim reshapes, and the
    # two matmuls issue back-to-back (no mean -> centered -> var dependency).
    avg = avg_ref[...]
    mean = jnp.dot(y, avg, preferred_element_type=jnp.float32)        # E[y]
    meansq = jnp.dot(y * y, avg, preferred_element_type=jnp.float32)  # E[y^2]
    var = jnp.maximum(meansq - mean * mean, 0.0)                      # biased
    yn = (y - mean) * lax.rsqrt(var + EPS) * g_ref[...] + b_ref[...]  # (M, C_EXP)

    # 2x2 pixel-shuffle expressed purely as the store pattern:
    #   out[b*H + h, p1*W + w, :] = yn[b*L + h*W + w, p1*HALF:(p1+1)*HALF]
    # Two hoisted lane slices + two sublane-aligned slab stores.
    top = yn[:, :HALF].reshape(B * H, W, HALF)      # p1 = 0
    bot = yn[:, HALF:].reshape(B * H, W, HALF)      # p1 = 1
    out_ref[:, 0:W, :] = top
    out_ref[:, W:2 * W, :] = bot


# ---------------- pallas_call wrapper ----------------------------------------
def patch_expand(x, w_expand, gamma, beta):
    """x: (B, H*W, DIM) -> (B, 4*H*W, DIM//2), matching PatchExpand.forward."""
    x_flat = x.reshape(M, DIM).astype(jnp.bfloat16)          # fold batch into M
    w_bf = w_expand.astype(jnp.bfloat16)
    g_t = jnp.tile(gamma, 4).reshape(1, C_EXP).astype(jnp.float32)
    b_t = jnp.tile(beta, 4).reshape(1, C_EXP).astype(jnp.float32)
    avg = jnp.asarray(_AVG)                                  # baked constant

    out = pl.pallas_call(
        patch_expand_kernel,
        out_shape=jax.ShapeDtypeStruct((B * H, 2 * W, HALF), jnp.float32),
        grid=(1,),
        in_specs=[
            pl.BlockSpec((M, DIM), lambda i: (0, 0)),
            pl.BlockSpec((DIM, C_EXP), lambda i: (0, 0)),
            pl.BlockSpec((C_EXP, C_EXP), lambda i: (0, 0)),
            pl.BlockSpec((1, C_EXP), lambda i: (0, 0)),
            pl.BlockSpec((1, C_EXP), lambda i: (0, 0)),
        ],
        out_specs=pl.BlockSpec((B * H, 2 * W, HALF), lambda i: (0, 0, 0)),
        compiler_params=pltpu.CompilerParams(dimension_semantics=("arbitrary",)),
    )(x_flat, w_bf, avg, g_t, b_t)

    # pure row-major reshape (free): (B*H, 2W, 2*C_OUT) -> (B, (2H)*(2W), C_OUT)
    return out.reshape(B, 4 * L, C_OUT)


# ---------------- pure-JAX reference (mirrors the PyTorch forward) -----------
def patch_expand_ref(x, w_expand, gamma, beta):
    y = jnp.matmul(x, w_expand, precision=lax.Precision.HIGHEST)  # (B, L, 2*DIM)
    y = y.reshape(B, H, W, 2, 2, C_OUT)          # (b, h, w, p1, p2, c)
    y = y.transpose(0, 1, 3, 2, 4, 5)            # (b, h, p1, w, p2, c)
    y = y.reshape(B, 4 * L, C_OUT)
    mean = jnp.mean(y, axis=-1, keepdims=True)
    var = jnp.mean(jnp.square(y - mean), axis=-1, keepdims=True)
    return (y - mean) * lax.rsqrt(var + EPS) * gamma + beta


if __name__ == "__main__":
    key = jax.random.PRNGKey(0)
    kx, kw, kg, kb = jax.random.split(key, 4)
    x = jax.random.normal(kx, (B, L, DIM), jnp.float32)               # (2, 64, 32)
    # nn.Linear(dim, 2*dim, bias=False): stored here already transposed (DIM, 2*DIM)
    w_expand = 0.02 * jax.random.normal(kw, (DIM, C_EXP), jnp.float32)
    # LayerNorm(dim//2) affine params (non-trivial values to exercise them)
    gamma = 1.0 + 0.1 * jax.random.normal(kg, (C_OUT,), jnp.float32)
    beta = 0.1 * jax.random.normal(kb, (C_OUT,), jnp.float32)

    fn = jax.jit(lambda inp: patch_expand(inp, w_expand, gamma, beta))
    out = jax.block_until_ready(fn(x))

    assert out.shape == (B, 4 * L, C_OUT) and out.dtype == jnp.float32
    assert bool(jnp.all(jnp.isfinite(out)))

    ref = patch_expand_ref(x, w_expand, gamma, beta)
    max_err = float(jnp.max(jnp.abs(out - ref)))
    # bf16 MXU operands vs. an f32 HIGHEST-precision reference -> loose tolerance
    assert max_err < 5e-2, f"max abs diff vs reference: {max_err}"

    print("KERNEL_OK")
</pallas_src>

<mosaic_0001>
module attributes {stable_mosaic.version = 11 : i64} {
  func.func @patch_expand_kernel(%arg0: i32, %arg1: memref<128x32xbf16, #tpu.memory_space<vmem>>, %arg2: memref<32x64xbf16, #tpu.memory_space<vmem>>, %arg3: memref<64x64xf32, #tpu.memory_space<vmem>>, %arg4: memref<1x64xf32, #tpu.memory_space<vmem>>, %arg5: memref<1x64xf32, #tpu.memory_space<vmem>>, %arg6: memref<16x16x32xf32, #tpu.memory_space<vmem>>) attributes {dimension_semantics = [#tpu.dimension_semantics<arbitrary>], iteration_bounds = array<i64: 1>, scalar_prefetch = 0 : i64, scratch_operands = 0 : i64, tpu.core_type = #tpu.core_type<tc>, window_params = [{pipeline_mode = #tpu.pipeline_mode<synchronous>, transform_indices = @transform_0, window_bounds = array<i64: 128, 32>}, {pipeline_mode = #tpu.pipeline_mode<synchronous>, transform_indices = @transform_1, window_bounds = array<i64: 32, 64>}, {pipeline_mode = #tpu.pipeline_mode<synchronous>, transform_indices = @transform_2, window_bounds = array<i64: 64, 64>}, {pipeline_mode = #tpu.pipeline_mode<synchronous>, transform_indices = @transform_3, window_bounds = array<i64: 1, 64>}, {pipeline_mode = #tpu.pipeline_mode<synchronous>, transform_indices = @transform_4, window_bounds = array<i64: 1, 64>}, {pipeline_mode = #tpu.pipeline_mode<synchronous>, transform_indices = @transform_5, window_bounds = array<i64: 16, 16, 32>}]} {
    %c0 = arith.constant 0 : index
    %c0_0 = arith.constant 0 : index
    %0 = vector.load %arg1[%c0, %c0_0] : memref<128x32xbf16, #tpu.memory_space<vmem>>, vector<128x32xbf16>
    %c0_1 = arith.constant 0 : index
    %c0_2 = arith.constant 0 : index
    %1 = vector.load %arg2[%c0_1, %c0_2] : memref<32x64xbf16, #tpu.memory_space<vmem>>, vector<32x64xbf16>
    %cst = arith.constant dense<0.000000e+00> : vector<128x64xf32>
    %2 = tpu.matmul %0, %1, %cst {dimension_numbers = #tpu.dot_dimension_numbers<[1], [0], [0], [1], [0, 0, 1, 1], [], []>} : vector<128x32xbf16>, vector<32x64xbf16>, vector<128x64xf32> -> vector<128x64xf32>
    %c0_3 = arith.constant 0 : index
    %c0_4 = arith.constant 0 : index
    %3 = vector.load %arg3[%c0_3, %c0_4] : memref<64x64xf32, #tpu.memory_space<vmem>>, vector<64x64xf32>
    %cst_5 = arith.constant dense<0.000000e+00> : vector<128x64xf32>
    %4 = tpu.matmul %2, %3, %cst_5 {dimension_numbers = #tpu.dot_dimension_numbers<[1], [0], [0], [1], [0, 0, 1, 1], [], []>} : vector<128x64xf32>, vector<64x64xf32>, vector<128x64xf32> -> vector<128x64xf32>
    %5 = arith.mulf %2, %2 : vector<128x64xf32>
    %cst_6 = arith.constant dense<0.000000e+00> : vector<128x64xf32>
    %6 = tpu.matmul %5, %3, %cst_6 {dimension_numbers = #tpu.dot_dimension_numbers<[1], [0], [0], [1], [0, 0, 1, 1], [], []>} : vector<128x64xf32>, vector<64x64xf32>, vector<128x64xf32> -> vector<128x64xf32>
    %7 = arith.mulf %4, %4 : vector<128x64xf32>
    %8 = arith.subf %6, %7 : vector<128x64xf32>
    %cst_7 = arith.constant 0.000000e+00 : f32
    %9 = vector.broadcast %cst_7 : f32 to vector<128x64xf32>
    %10 = arith.maximumf %8, %9 : vector<128x64xf32>
    %11 = arith.subf %2, %4 : vector<128x64xf32>
    %cst_8 = arith.constant 9.99999974E-6 : f32
    %12 = vector.broadcast %cst_8 : f32 to vector<128x64xf32>
    %13 = arith.addf %10, %12 : vector<128x64xf32>
    %14 = math.rsqrt %13 : vector<128x64xf32>
    %15 = arith.mulf %11, %14 : vector<128x64xf32>
    %c0_9 = arith.constant 0 : index
    %c0_10 = arith.constant 0 : index
    %16 = vector.load %arg4[%c0_9, %c0_10] : memref<1x64xf32, #tpu.memory_space<vmem>>, vector<1x64xf32>
    %17 = vector.broadcast %16 : vector<1x64xf32> to vector<128x64xf32>
    %18 = arith.mulf %15, %17 : vector<128x64xf32>
    %c0_11 = arith.constant 0 : index
    %c0_12 = arith.constant 0 : index
    %19 = vector.load %arg5[%c0_11, %c0_12] : memref<1x64xf32, #tpu.memory_space<vmem>>, vector<1x64xf32>
    %20 = vector.broadcast %19 : vector<1x64xf32> to vector<128x64xf32>
    %21 = arith.addf %18, %20 : vector<128x64xf32>
    %22 = vector.extract_strided_slice %21 {offsets = [0, 0], sizes = [128, 32], strides = [1, 1]} : vector<128x64xf32> to vector<128x32xf32>
    %23 = vector.shape_cast %22 : vector<128x32xf32> to vector<16x8x32xf32>
    %24 = vector.extract_strided_slice %21 {offsets = [0, 32], sizes = [128, 32], strides = [1, 1]} : vector<128x64xf32> to vector<128x32xf32>
    %25 = vector.shape_cast %24 : vector<128x32xf32> to vector<16x8x32xf32>
    %c0_13 = arith.constant 0 : index
    %c0_14 = arith.constant 0 : index
    %c0_15 = arith.constant 0 : index
    %26 = vector.load %arg6[%c0_13, %c0_14, %c0_15] : memref<16x16x32xf32, #tpu.memory_space<vmem>>, vector<16x8x32xf32>
    tpu.vector_store %arg6[%c0_13, %c0_14, %c0_15], %23 {strides = array<i32>} : memref<16x16x32xf32, #tpu.memory_space<vmem>>, vector<16x8x32xf32>,
    %c0_16 = arith.constant 0 : index
    %c8 = arith.constant 8 : index
    %c0_17 = arith.constant 0 : index
    %27 = vector.load %arg6[%c0_16, %c8, %c0_17] : memref<16x16x32xf32, #tpu.memory_space<vmem>>, vector<16x8x32xf32>
    tpu.vector_store %arg6[%c0_16, %c8, %c0_17], %25 {strides = array<i32>} : memref<16x16x32xf32, #tpu.memory_space<vmem>>, vector<16x8x32xf32>,
    return
  }
  func.func @transform_0(%arg0: i32) -> (i32, i32) {
    %c0_i32 = arith.constant 0 : i32
    %c0_i32_0 = arith.constant 0 : i32
    %c0_i32_1 = arith.constant 0 : i32
    return %c0_i32, %c0_i32_0 : i32, i32
  }
  func.func @transform_1(%arg0: i32) -> (i32, i32) {
    %c0_i32 = arith.constant 0 : i32
    %c0_i32_0 = arith.constant 0 : i32
    %c0_i32_1 = arith.constant 0 : i32
    return %c0_i32, %c0_i32_0 : i32, i32
  }
  func.func @transform_2(%arg0: i32) -> (i32, i32) {
    %c0_i32 = arith.constant 0 : i32
    %c0_i32_0 = arith.constant 0 : i32
    %c0_i32_1 = arith.constant 0 : i32
    return %c0_i32, %c0_i32_0 : i32, i32
  }
  func.func @transform_3(%arg0: i32) -> (i32, i32) {
    %c0_i32 = arith.constant 0 : i32
    %c0_i32_0 = arith.constant 0 : i32
    %c0_i32_1 = arith.constant 0 : i32
    return %c0_i32, %c0_i32_0 : i32, i32
  }
  func.func @transform_4(%arg0: i32) -> (i32, i32) {
    %c0_i32 = arith.constant 0 : i32
    %c0_i32_0 = arith.constant 0 : i32
    %c0_i32_1 = arith.constant 0 : i32
    return %c0_i32, %c0_i32_0 : i32, i32
  }
  func.func @transform_5(%arg0: i32) -> (i32, i32, i32) {
    %c0_i32 = arith.constant 0 : i32
    %c0_i32_0 = arith.constant 0 : i32
    %c0_i32_1 = arith.constant 0 : i32
    %c0_i32_2 = arith.constant 0 : i32
    return %c0_i32, %c0_i32_0, %c0_i32_1 : i32, i32, i32
  }
}

</mosaic_0001>

<llo_original>
// kernel: tile.10
$region0: #{tile.10}
  #allocation0 [shape = 's32[1]{0}', space=sflag, size = 0x4, scoped, tag = 'scoped memory for tile.10']
  %s0 = inlined_call_operand.vmem [shape: f32[16], index: 0, kind: input, shape index: {}]
  %s1 = inlined_call_operand.vmem [shape: f32[4,16], index: 1, kind: output, shape index: {}]
  // Predicated region
  $region2: #{tile.10} parent=0 // pred_check
    _
  $region3: #{tile.10} parent=0 // pred_check_branch
    %3 = sbr.rel (0) target = $region5
  $region4: #{tile.10} parent=0 // pred_region
    _
  $region5: #{tile.10} parent=0 // pred_fallthru
    _
  %v4 = vld [vmem:[%s0] ss:$0 sm:$0xff]
  %5 = vst [vmem:[%s1] sm:$0xf] %v4

// kernel: tile.11
$region0: #{tile.11}
  %s0 = inlined_call_operand.vmem [shape: f32[4,16], index: 0, kind: input, shape index: {}]
  %s1 = inlined_call_operand.vmem [shape: f32[1,64], index: 1, kind: output, shape index: {}]
  $region1: #{tile.11} parent=0
    #allocation0 [shape = 'u8[4096]{0}', space=vmem, size = 0x1000, scoped, tag = 'scoped mem for output reshape']
    #allocation1 [shape = 'u8[4096]{0}', space=vmem, size = 0x1000, scoped, tag = 'scoped mem for input reshape']
    %s3 = sshllo.u32 0, 4
    %v4 = vld [vmem:[%s0] sm:%s3]
    %5 = vst [vmem:[#allocation1] sm:%s3] %v4
    %v6 = vld [vmem:[#allocation1] sm:$0x1]
    %vm7 = vcmask 130048
    %8 = vst.msk [vmem:[#allocation0] sm:$0x1] %vm7, %v6
    %s9 = scalar_lea.vmem [#allocation1], 3
    %v10 = vld [vmem:[%s9] sm:$0x1]
    %11 = vrot.lane.b32.xlu0 %v10, 48
    %v12 = vpop.permute.xlu0 %11
    %vm13 = vcmask 523648
    %14 = vst.msk [vmem:[#allocation0] sm:$0x1] %vm13, %v12
    %s15 = scalar_lea.vmem [#allocation1], 2
    %v16 = vld [vmem:[%s15] sm:$0x1]
    %17 = vrot.lane.b32.xlu0 %v16, 32
    %v18 = vpop.permute.xlu0 %17
    %vm19 = vcmask 392448
    %20 = vst.msk [vmem:[#allocation0] sm:$0x1] %vm19, %v18
    %s21 = scalar_lea.vmem [#allocation1], 1
    %v22 = vld [vmem:[%s21] sm:$0x1]
    %23 = vrot.lane.b32.xlu0 %v22, 16
    %v24 = vpop.permute.xlu0 %23
    %vm25 = vcmask 261248
    %26 = vst.msk [vmem:[#allocation0] sm:$0x1] %vm25, %v24
    %s28 = sshllo.u32 0, 1
    %v30 = vld [vmem:[#allocation0] sm:%s28]
    %s31 = sshllo.u32 0, 1
    %32 = vst [vmem:[%s1] sm:%s31] %v30

// kernel: _lambda_.1
$region0: #{_lambda_.1}
  #allocation0 [shape = 'u32[]', space=smem, size = 0x4, offset = 0x4, fixed_abs, tag = 'smem constant byte address 0x4 - core index']
  #allocation1 [shape = 'u32[144,128]{1,0:T(1,128)}', space=vmem, size = 0x12000, scoped, tag = 'internal scratch']
  %s0 = inlined_call_operand.vmem [shape: bf16[128,32], index: 0, kind: input, shape index: {}]
  %s1 = inlined_call_operand.vmem [shape: bf16[32,64], index: 1, kind: input, shape index: {}]
  %s2 = inlined_call_operand.vmem [shape: f32[64,64], index: 2, kind: input, shape index: {}]
  %s3 = inlined_call_operand.vmem [shape: f32[1,64], index: 3, kind: input, shape index: {}]
  %s4 = inlined_call_operand.vmem [shape: f32[1,64], index: 4, kind: input, shape index: {}]
  %s5 = inlined_call_operand.vmem [shape: f32[16,16,32], index: 5, kind: output, shape index: {}]
  %s6 = sld [smem:[#allocation0]]
  $region30: #{_lambda_.1} parent=0
    _
  %s8 = ssub.s32 1, %s6
  %s9 = scalar_select 0, %s8, %s6
  // Predicated region
  $region2: #{_lambda_.1} parent=0 // pred_check
    _
  $region3: #{_lambda_.1} parent=0 // pred_check_branch
    %11 = sbr.rel (0) target = $region5
  $region4: #{_lambda_.1} parent=0 // pred_region
    _
  $region5: #{_lambda_.1} parent=0 // pred_fallthru
    _
  // Predicated region
  $region6: #{_lambda_.1} parent=0 // pred_check
    _
  $region7: #{_lambda_.1} parent=0 // pred_check_branch
    %13 = sbr.rel (0) target = $region9
  $region8: #{_lambda_.1} parent=0 // pred_region
    _
  $region9: #{_lambda_.1} parent=0 // pred_fallthru
    _
  // Predicated region
  $region10: #{_lambda_.1} parent=0 // pred_check
    _
  $region11: #{_lambda_.1} parent=0 // pred_check_branch
    %15 = sbr.rel (0) target = $region13
  $region12: #{_lambda_.1} parent=0 // pred_region
    _
  $region13: #{_lambda_.1} parent=0 // pred_fallthru
    _
  // Predicated region
  $region14: #{_lambda_.1} parent=0 // pred_check
    _
  $region15: #{_lambda_.1} parent=0 // pred_check_branch
    %17 = sbr.rel (0) target = $region17
  $region16: #{_lambda_.1} parent=0 // pred_region
    _
  $region17: #{_lambda_.1} parent=0 // pred_fallthru
    _
  // Predicated region
  $region18: #{_lambda_.1} parent=0 // pred_check
    _
  $region19: #{_lambda_.1} parent=0 // pred_check_branch
    %19 = sbr.rel (0) target = $region21
  $region20: #{_lambda_.1} parent=0 // pred_region
    _
  $region21: #{_lambda_.1} parent=0 // pred_fallthru
    _
  %v21 = vld [vmem:[%s0] sm:$0xf]
  %v22 = vld [vmem:[%s0 + $0x4] sm:$0xf]
  %v23 = vld [vmem:[%s0 + $0x8] sm:$0xf]
  %v24 = vld [vmem:[%s0 + $0xc] sm:$0xf]
  %v25 = vld [vmem:[%s0 + $0x10] sm:$0xf]
  %v26 = vld [vmem:[%s0 + $0x14] sm:$0xf]
  %v27 = vld [vmem:[%s0 + $0x18] sm:$0xf]
  %v28 = vld [vmem:[%s0 + $0x1c] sm:$0xf]
  %v29 = vld [vmem:[%s0 + $0x20] sm:$0xf]
  %v30 = vld [vmem:[%s0 + $0x24] sm:$0xf]
  %v31 = vld [vmem:[%s0 + $0x28] sm:$0xf]
  %v32 = vld [vmem:[%s0 + $0x2c] sm:$0xf]
  %v33 = vld [vmem:[%s0 + $0x30] sm:$0xf]
  %v34 = vld [vmem:[%s0 + $0x34] sm:$0xf]
  %v35 = vld [vmem:[%s0 + $0x38] sm:$0xf]
  %v36 = vld [vmem:[%s0 + $0x3c] sm:$0xf]
  %v37 = vld [vmem:[%s1] sm:$0xf]
  %v38 = vld [vmem:[%s1 + $0x4] sm:$0xf]
  %v39 = vld [vmem:[%s1 + $0x8] sm:$0xf]
  %v40 = vld [vmem:[%s1 + $0xc] sm:$0xf]
  %v57 = vunpack.c.l.b16 %v21
  %v58 = vunpack.c.l.b16 %v22
  %v59 = vunpack.c.l.b16 %v23
  %v60 = vunpack.c.l.b16 %v24
  %v61 = vunpack.c.l.b16 %v25
  %v62 = vunpack.c.l.b16 %v26
  %v63 = vunpack.c.l.b16 %v27
  %v64 = vunpack.c.l.b16 %v28
  %v65 = vunpack.c.l.b16 %v29
  %v66 = vunpack.c.l.b16 %v30
  %v67 = vunpack.c.l.b16 %v31
  %v68 = vunpack.c.l.b16 %v32
  %v69 = vunpack.c.l.b16 %v33
  %v70 = vunpack.c.l.b16 %v34
  %v71 = vunpack.c.l.b16 %v35
  %v72 = vunpack.c.l.b16 %v36
  %v73 = vpack.c.b16 %v58, %v57
  %v74 = vpack.c.b16 %v60, %v59
  %v75 = vpack.c.b16 %v62, %v61
  %v76 = vpack.c.b16 %v64, %v63
  %v77 = vpack.c.b16 %v66, %v65
  %v78 = vpack.c.b16 %v68, %v67
  %v79 = vpack.c.b16 %v70, %v69
  %v80 = vpack.c.b16 %v72, %v71
  %v85 = vunpack.c.l.b16 %v37
  %v86 = vunpack.c.l.b16 %v38
  %v87 = vunpack.c.l.b16 %v39
  %v88 = vunpack.c.l.b16 %v40
  %v89 = vpack.c.b16 %v86, %v85
  %v90 = vpack.c.b16 %v88, %v87
  %vm93 = vcmask 261120
  %v95 = vsel %vm93, %v73, 0
  %v98 = vsel %vm93, %v74, 0
  %v101 = vsel %vm93, %v75, 0
  %v104 = vsel %vm93, %v76, 0
  %v107 = vsel %vm93, %v77, 0
  %v110 = vsel %vm93, %v78, 0
  %v113 = vsel %vm93, %v79, 0
  %v116 = vsel %vm93, %v80, 0
  %118 = vmatprep.subr.bf16.mxu0 0
  %119 = vmatpush1.bf16.msra.mxu0 %v89
  %120 = vmatprep.subr.bf16.mxu0 0
  %121 = vmatpush1.bf16.msra.mxu0 %v90
  %122 = vmatprep.subr.bf16.mxu0 0
  %123 = vmatpush1.bf16.msra.mxu0 0
  %124 = vmatprep.subr.bf16.mxu0 0
  %125 = vmatpush1.bf16.msra.mxu0 0
  %126 = vmatprep.subr.bf16.mxu0 0
  %127 = vmatpush1.bf16.msra.mxu0 0
  %128 = vmatprep.subr.bf16.mxu0 0
  %129 = vmatpush1.bf16.msra.mxu0 0
  %130 = vmatprep.subr.bf16.mxu0 0
  %131 = vmatpush1.bf16.msra.mxu0 0
  %132 = vmatprep.subr.bf16.mxu0 0
  %133 = vmatpush1.bf16.msra.mxu0 0
  %134 = vmatprep.subr.bf16.mxu0 0
  %135 = vmatpush1.bf16.msra.mxu0 0
  %136 = vmatprep.subr.bf16.mxu0 0
  %137 = vmatpush1.bf16.msra.mxu0 0
  %138 = vmatprep.subr.bf16.mxu0 0
  %139 = vmatpush1.bf16.msra.mxu0 0
  %140 = vmatprep.subr.bf16.mxu0 0
  %141 = vmatpush1.bf16.msra.mxu0 0
  %142 = vmatprep.subr.bf16.mxu0 0
  %143 = vmatpush1.bf16.msra.mxu0 0
  %144 = vmatprep.subr.bf16.mxu0 0
  %145 = vmatpush1.bf16.msra.mxu0 0
  %146 = vmatprep.subr.bf16.mxu0 0
  %147 = vmatpush1.bf16.msra.mxu0 0
  %148 = vmatprep.subr.bf16.mxu0 0
  %149 = vmatpush1.bf16.msra.mxu0 0
  %150 = vmatprep.mubr.bf16.mxu0 0
  %151 = vmatmul.mubr.bf16.gmra.mrb[0].mxu0 %v95
  %v152 = vpop.f32.mrb[0].mxu0
  %v153 = vadd.f32 0.0, %v152
  %v154 = vpop.f32.mrb[0].mxu0
  %v155 = vpop.f32.mrb[0].mxu0
  %v156 = vadd.f32 0.0, %v155
  %v157 = vpop.f32.mrb[0].mxu0
  %158 = vmatprep.mubr.bf16.mxu0 0
  %159 = vmatmul.mubr.bf16.gmra.mrb[0].mxu0 %v98
  %v160 = vpop.f32.mrb[0].mxu0
  %v161 = vadd.f32 0.0, %v160
  %v162 = vpop.f32.mrb[0].mxu0
  %v163 = vpop.f32.mrb[0].mxu0
  %v164 = vadd.f32 0.0, %v163
  %v165 = vpop.f32.mrb[0].mxu0
  %166 = vmatprep.mubr.bf16.mxu0 0
  %167 = vmatmul.mubr.bf16.gmra.mrb[0].mxu0 %v101
  %v168 = vpop.f32.mrb[0].mxu0
  %v169 = vadd.f32 0.0, %v168
  %v170 = vpop.f32.mrb[0].mxu0
  %v171 = vpop.f32.mrb[0].mxu0
  %v172 = vadd.f32 0.0, %v171
  %v173 = vpop.f32.mrb[0].mxu0
  %174 = vmatprep.mubr.bf16.mxu0 0
  %175 = vmatmul.mubr.bf16.gmra.mrb[0].mxu0 %v104
  %v176 = vpop.f32.mrb[0].mxu0
  %v177 = vadd.f32 0.0, %v176
  %v178 = vpop.f32.mrb[0].mxu0
  %v179 = vpop.f32.mrb[0].mxu0
  %v180 = vadd.f32 0.0, %v179
  %v181 = vpop.f32.mrb[0].mxu0
  %182 = vmatprep.mubr.bf16.mxu0 0
  %183 = vmatmul.mubr.bf16.gmra.mrb[0].mxu0 %v107
  %v184 = vpop.f32.mrb[0].mxu0
  %v185 = vadd.f32 0.0, %v184
  %v186 = vpop.f32.mrb[0].mxu0
  %v187 = vpop.f32.mrb[0].mxu0
  %v188 = vadd.f32 0.0, %v187
  %v189 = vpop.f32.mrb[0].mxu0
  %190 = vmatprep.mubr.bf16.mxu0 0
  %191 = vmatmul.mubr.bf16.gmra.mrb[0].mxu0 %v110
  %v192 = vpop.f32.mrb[0].mxu0
  %v193 = vadd.f32 0.0, %v192
  %v194 = vpop.f32.mrb[0].mxu0
  %v195 = vpop.f32.mrb[0].mxu0
  %v196 = vadd.f32 0.0, %v195
  %v197 = vpop.f32.mrb[0].mxu0
  %198 = vmatprep.mubr.bf16.mxu0 0
  %199 = vmatmul.mubr.bf16.gmra.mrb[0].mxu0 %v113
  %v200 = vpop.f32.mrb[0].mxu0
  %v201 = vadd.f32 0.0, %v200
  %v202 = vpop.f32.mrb[0].mxu0
  %v203 = vpop.f32.mrb[0].mxu0
  %v204 = vadd.f32 0.0, %v203
  %v205 = vpop.f32.mrb[0].mxu0
  %206 = vmatprep.mubr.bf16.mxu0 0
  %207 = vmatmul.mubr.bf16.gmra.mrb[0].mxu0 %v116
  %v208 = vpop.f32.mrb[0].mxu0
  %v209 = vadd.f32 0.0, %v208
  %v210 = vpop.f32.mrb[0].mxu0
  %v211 = vpop.f32.mrb[0].mxu0
  %v212 = vadd.f32 0.0, %v211
  %v213 = vpop.f32.mrb[0].mxu0
  %214 = vdwg.mxu0
  %v215 = vld [vmem:[%s2] sm:$0xff]
  %v216 = vld [vmem:[%s2 + $0x8] sm:$0xff]
  %v217 = vld [vmem:[%s2 + $0x10] sm:$0xff]
  %v218 = vld [vmem:[%s2 + $0x18] sm:$0xff]
  %v219 = vld [vmem:[%s2 + $0x20] sm:$0xff]
  %v220 = vld [vmem:[%s2 + $0x28] sm:$0xff]
  %v221 = vld [vmem:[%s2 + $0x30] sm:$0xff]
  %v222 = vld [vmem:[%s2 + $0x38] sm:$0xff]
  %vm223 = vcmask 523264
  %v225 = vsel %vm223, %v153, 0
  %v228 = vsel %vm223, %v156, 0
  %v231 = vsel %vm223, %v161, 0
  %v234 = vsel %vm223, %v164, 0
  %v237 = vsel %vm223, %v169, 0
  %v240 = vsel %vm223, %v172, 0
  %v243 = vsel %vm223, %v177, 0
  %v246 = vsel %vm223, %v180, 0
  %v249 = vsel %vm223, %v185, 0
  %v252 = vsel %vm223, %v188, 0
  %v255 = vsel %vm223, %v193, 0
  %v258 = vsel %vm223, %v196, 0
  %v261 = vsel %vm223, %v201, 0
  %v264 = vsel %vm223, %v204, 0
  %v267 = vsel %vm223, %v209, 0
  %v270 = vsel %vm223, %v212, 0
  %272 = vmatprep.subr.mxu0 0.0
  %273 = vmatpush1.msra.mxu0 %v215
  %274 = vmatprep.subr.mxu0 0.0
  %275 = vmatpush1.msra.mxu0 %v216
  %276 = vmatprep.subr.mxu0 0.0
  %277 = vmatpush1.msra.mxu0 %v217
  %278 = vmatprep.subr.mxu0 0.0
  %279 = vmatpush1.msra.mxu0 %v218
  %280 = vmatprep.subr.mxu0 0.0
  %281 = vmatpush1.msra.mxu0 %v219
  %282 = vmatprep.subr.mxu0 0.0
  %283 = vmatpush1.msra.mxu0 %v220
  %284 = vmatprep.subr.mxu0 0.0
  %285 = vmatpush1.msra.mxu0 %v221
  %286 = vmatprep.subr.mxu0 0.0
  %287 = vmatpush1.msra.mxu0 %v222
  %288 = vmatprep.subr.mxu0 0.0
  %289 = vmatpush1.msra.mxu0 0.0
  %290 = vmatprep.subr.mxu0 0.0
  %291 = vmatpush1.msra.mxu0 0.0
  %292 = vmatprep.subr.mxu0 0.0
  %293 = vmatpush1.msra.mxu0 0.0
  %294 = vmatprep.subr.mxu0 0.0
  %295 = vmatpush1.msra.mxu0 0.0
  %296 = vmatprep.subr.mxu0 0.0
  %297 = vmatpush1.msra.mxu0 0.0
  %298 = vmatprep.subr.mxu0 0.0
  %299 = vmatpush1.msra.mxu0 0.0
  %300 = vmatprep.subr.mxu0 0.0
  %301 = vmatpush1.msra.mxu0 0.0
  %302 = vmatprep.subr.mxu0 0.0
  %303 = vmatpush1.msra.mxu0 0.0
  %304 = vmatprep.subr.mxu0 0.0
  %305 = vmatpush1.msra.mxu0 0.0
  %306 = vmatprep.subr.mxu0 0.0
  %307 = vmatpush1.msra.mxu0 0.0
  %308 = vmatprep.subr.mxu0 0.0
  %309 = vmatpush1.msra.mxu0 0.0
  %310 = vmatprep.subr.mxu0 0.0
  %311 = vmatpush1.msra.mxu0 0.0
  %312 = vmatprep.subr.mxu0 0.0
  %313 = vmatpush1.msra.mxu0 0.0
  %314 = vmatprep.subr.mxu0 0.0
  %315 = vmatpush1.msra.mxu0 0.0
  %316 = vmatprep.subr.mxu0 0.0
  %317 = vmatpush1.msra.mxu0 0.0
  %318 = vmatprep.subr.mxu0 0.0
  %319 = vmatpush1.msra.mxu0 0.0
  %320 = vmatprep.subr.mxu0 0.0
  %321 = vmatpush1.msra.mxu0 0.0
  %322 = vmatprep.subr.mxu0 0.0
  %323 = vmatpush1.msra.mxu0 0.0
  %324 = vmatprep.subr.mxu0 0.0
  %325 = vmatpush1.msra.mxu0 0.0
  %326 = vmatprep.subr.mxu0 0.0
  %327 = vmatpush1.msra.mxu0 0.0
  %328 = vmatprep.subr.mxu0 0.0
  %329 = vmatpush1.msra.mxu0 0.0
  %330 = vmatprep.subr.mxu0 0.0
  %331 = vmatpush1.msra.mxu0 0.0
  %332 = vmatprep.subr.mxu0 0.0
  %333 = vmatpush1.msra.mxu0 0.0
  %334 = vmatprep.subr.mxu0 0.0
  %335 = vmatpush1.msra.mxu0 0.0
  %336 = vmatprep.mubr.f32.mxu0 0.0
  %337 = vmatmul.mubr.f32.gmra.mrb[0].mxu0 %v225
  %v338 = vpop.f32.mrb[0].mxu0
  %v339 = vadd.f32 0.0, %v338
  %v340 = vpop.f32.mrb[0].mxu0
  %341 = vmatprep.mubr.f32.mxu0 0.0
  %342 = vmatmul.mubr.f32.gmra.mrb[0].mxu0 %v228
  %v343 = vpop.f32.mrb[0].mxu0
  %v344 = vadd.f32 0.0, %v343
  %v345 = vpop.f32.mrb[0].mxu0
  %346 = vmatprep.mubr.f32.mxu0 0.0
  %347 = vmatmul.mubr.f32.gmra.mrb[0].mxu0 %v231
  %v348 = vpop.f32.mrb[0].mxu0
  %v349 = vadd.f32 0.0, %v348
  %v350 = vpop.f32.mrb[0].mxu0
  %351 = vmatprep.mubr.f32.mxu0 0.0
  %352 = vmatmul.mubr.f32.gmra.mrb[0].mxu0 %v234
  %v353 = vpop.f32.mrb[0].mxu0
  %v354 = vadd.f32 0.0, %v353
  %v355 = vpop.f32.mrb[0].mxu0
  %356 = vmatprep.mubr.f32.mxu0 0.0
  %357 = vmatmul.mubr.f32.gmra.mrb[0].mxu0 %v237
  %v358 = vpop.f32.mrb[0].mxu0
  %v359 = vadd.f32 0.0, %v358
  %v360 = vpop.f32.mrb[0].mxu0
  %361 = vmatprep.mubr.f32.mxu0 0.0
  %362 = vmatmul.mubr.f32.gmra.mrb[0].mxu0 %v240
  %v363 = vpop.f32.mrb[0].mxu0
  %v364 = vadd.f32 0.0, %v363
  %v365 = vpop.f32.mrb[0].mxu0
  %366 = vmatprep.mubr.f32.mxu0 0.0
  %367 = vmatmul.mubr.f32.gmra.mrb[0].mxu0 %v243
  %v368 = vpop.f32.mrb[0].mxu0
  %v369 = vadd.f32 0.0, %v368
  %v370 = vpop.f32.mrb[0].mxu0
  %371 = vmatprep.mubr.f32.mxu0 0.0
  %372 = vmatmul.mubr.f32.gmra.mrb[0].mxu0 %v246
  %v373 = vpop.f32.mrb[0].mxu0
  %v374 = vadd.f32 0.0, %v373
  %v375 = vpop.f32.mrb[0].mxu0
  %376 = vmatprep.mubr.f32.mxu0 0.0
  %377 = vmatmul.mubr.f32.gmra.mrb[0].mxu0 %v249
  %v378 = vpop.f32.mrb[0].mxu0
  %v379 = vadd.f32 0.0, %v378
  %v380 = vpop.f32.mrb[0].mxu0
  %381 = vmatprep.mubr.f32.mxu0 0.0
  %382 = vmatmul.mubr.f32.gmra.mrb[0].mxu0 %v252
  %v383 = vpop.f32.mrb[0].mxu0
  %v384 = vadd.f32 0.0, %v383
  %v385 = vpop.f32.mrb[0].mxu0
  %386 = vmatprep.mubr.f32.mxu0 0.0
  %387 = vmatmul.mubr.f32.gmra.mrb[0].mxu0 %v255
  %v388 = vpop.f32.mrb[0].mxu0
  %v389 = vadd.f32 0.0, %v388
  %v390 = vpop.f32.mrb[0].mxu0
  %391 = vmatprep.mubr.f32.mxu0 0.0
  %392 = vmatmul.mubr.f32.gmra.mrb[0].mxu0 %v258
  %v393 = vpop.f32.mrb[0].mxu0
  %v394 = vadd.f32 0.0, %v393
  %v395 = vpop.f32.mrb[0].mxu0
  %396 = vmatprep.mubr.f32.mxu0 0.0
  %397 = vmatmul.mubr.f32.gmra.mrb[0].mxu0 %v261
  %v398 = vpop.f32.mrb[0].mxu0
  %v399 = vadd.f32 0.0, %v398
  %v400 = vpop.f32.mrb[0].mxu0
  %401 = vmatprep.mubr.f32.mxu0 0.0
  %402 = vmatmul.mubr.f32.gmra.mrb[0].mxu0 %v264
  %v403 = vpop.f32.mrb[0].mxu0
  %v404 = vadd.f32 0.0, %v403
  %v405 = vpop.f32.mrb[0].mxu0
  %406 = vmatprep.mubr.f32.mxu0 0.0
  %407 = vmatmul.mubr.f32.gmra.mrb[0].mxu0 %v267
  %v408 = vpop.f32.mrb[0].mxu0
  %v409 = vadd.f32 0.0, %v408
  %v410 = vpop.f32.mrb[0].mxu0
  %411 = vmatprep.mubr.f32.mxu0 0.0
  %412 = vmatmul.mubr.f32.gmra.mrb[0].mxu0 %v270
  %v413 = vpop.f32.mrb[0].mxu0
  %v414 = vadd.f32 0.0, %v413
  %v415 = vpop.f32.mrb[0].mxu0
  %416 = vdwg.mxu0
  %v417 = vmul.f32 %v153, %v153
  %v418 = vmul.f32 %v156, %v156
  %v419 = vmul.f32 %v161, %v161
  %v420 = vmul.f32 %v164, %v164
  %v421 = vmul.f32 %v169, %v169
  %v422 = vmul.f32 %v172, %v172
  %v423 = vmul.f32 %v177, %v177
  %v424 = vmul.f32 %v180, %v180
  %v425 = vmul.f32 %v185, %v185
  %v426 = vmul.f32 %v188, %v188
  %v427 = vmul.f32 %v193, %v193
  %v428 = vmul.f32 %v196, %v196
  %v429 = vmul.f32 %v201, %v201
  %v430 = vmul.f32 %v204, %v204
  %v431 = vmul.f32 %v209, %v209
  %v432 = vmul.f32 %v212, %v212
  %v434 = vsel %vm223, %v417, 0
  %v437 = vsel %vm223, %v418, 0
  %v440 = vsel %vm223, %v419, 0
  %v443 = vsel %vm223, %v420, 0
  %v446 = vsel %vm223, %v421, 0
  %v449 = vsel %vm223, %v422, 0
  %v452 = vsel %vm223, %v423, 0
  %v455 = vsel %vm223, %v424, 0
  %v458 = vsel %vm223, %v425, 0
  %v461 = vsel %vm223, %v426, 0
  %v464 = vsel %vm223, %v427, 0
  %v467 = vsel %vm223, %v428, 0
  %v470 = vsel %vm223, %v429, 0
  %v473 = vsel %vm223, %v430, 0
  %v476 = vsel %vm223, %v431, 0
  %v479 = vsel %vm223, %v432, 0
  %481 = vmatprep.subr.mxu0 0.0
  %482 = vmatpush1.msra.mxu0 %v215
  %483 = vmatprep.subr.mxu0 0.0
  %484 = vmatpush1.msra.mxu0 %v216
  %485 = vmatprep.subr.mxu0 0.0
  %486 = vmatpush1.msra.mxu0 %v217
  %487 = vmatprep.subr.mxu0 0.0
  %488 = vmatpush1.msra.mxu0 %v218
  %489 = vmatprep.subr.mxu0 0.0
  %490 = vmatpush1.msra.mxu0 %v219
  %491 = vmatprep.subr.mxu0 0.0
  %492 = vmatpush1.msra.mxu0 %v220
  %493 = vmatprep.subr.mxu0 0.0
  %494 = vmatpush1.msra.mxu0 %v221
  %495 = vmatprep.subr.mxu0 0.0
  %496 = vmatpush1.msra.mxu0 %v222
  %497 = vmatprep.subr.mxu0 0.0
  %498 = vmatpush1.msra.mxu0 0.0
  %499 = vmatprep.subr.mxu0 0.0
  %500 = vmatpush1.msra.mxu0 0.0
  %501 = vmatprep.subr.mxu0 0.0
  %502 = vmatpush1.msra.mxu0 0.0
  %503 = vmatprep.subr.mxu0 0.0
  %504 = vmatpush1.msra.mxu0 0.0
  %505 = vmatprep.subr.mxu0 0.0
  %506 = vmatpush1.msra.mxu0 0.0
  %507 = vmatprep.subr.mxu0 0.0
  %508 = vmatpush1.msra.mxu0 0.0
  %509 = vmatprep.subr.mxu0 0.0
  %510 = vmatpush1.msra.mxu0 0.0
  %511 = vmatprep.subr.mxu0 0.0
  %512 = vmatpush1.msra.mxu0 0.0
  %513 = vmatprep.subr.mxu0 0.0
  %514 = vmatpush1.msra.mxu0 0.0
  %515 = vmatprep.subr.mxu0 0.0
  %516 = vmatpush1.msra.mxu0 0.0
  %517 = vmatprep.subr.mxu0 0.0
  %518 = vmatpush1.msra.mxu0 0.0
  %519 = vmatprep.subr.mxu0 0.0
  %520 = vmatpush1.msra.mxu0 0.0
  %521 = vmatprep.subr.mxu0 0.0
  %522 = vmatpush1.msra.mxu0 0.0
  %523 = vmatprep.subr.mxu0 0.0
  %524 = vmatpush1.msra.mxu0 0.0
  %525 = vmatprep.subr.mxu0 0.0
  %526 = vmatpush1.msra.mxu0 0.0
  %527 = vmatprep.subr.mxu0 0.0
  %528 = vmatpush1.msra.mxu0 0.0
  %529 = vmatprep.subr.mxu0 0.0
  %530 = vmatpush1.msra.mxu0 0.0
  %531 = vmatprep.subr.mxu0 0.0
  %532 = vmatpush1.msra.mxu0 0.0
  %533 = vmatprep.subr.mxu0 0.0
  %534 = vmatpush1.msra.mxu0 0.0
  %535 = vmatprep.subr.mxu0 0.0
  %536 = vmatpush1.msra.mxu0 0.0
  %537 = vmatprep.subr.mxu0 0.0
  %538 = vmatpush1.msra.mxu0 0.0
  %539 = vmatprep.subr.mxu0 0.0
  %540 = vmatpush1.msra.mxu0 0.0
  %541 = vmatprep.subr.mxu0 0.0
  %542 = vmatpush1.msra.mxu0 0.0
  %543 = vmatprep.subr.mxu0 0.0
  %544 = vmatpush1.msra.mxu0 0.0
  %545 = vmatprep.mubr.f32.mxu0 0.0
  %546 = vmatmul.mubr.f32.gmra.mrb[0].mxu0 %v434
  %v547 = vpop.f32.mrb[0].mxu0
  %v548 = vadd.f32 0.0, %v547
  %v549 = vpop.f32.mrb[0].mxu0
  %550 = vmatprep.mubr.f32.mxu0 0.0
  %551 = vmatmul.mubr.f32.gmra.mrb[0].mxu0 %v437
  %v552 = vpop.f32.mrb[0].mxu0
  %v553 = vadd.f32 0.0, %v552
  %v554 = vpop.f32.mrb[0].mxu0
  %555 = vmatprep.mubr.f32.mxu0 0.0
  %556 = vmatmul.mubr.f32.gmra.mrb[0].mxu0 %v440
  %v557 = vpop.f32.mrb[0].mxu0
  %v558 = vadd.f32 0.0, %v557
  %v559 = vpop.f32.mrb[0].mxu0
  %560 = vmatprep.mubr.f32.mxu0 0.0
  %561 = vmatmul.mubr.f32.gmra.mrb[0].mxu0 %v443
  %v562 = vpop.f32.mrb[0].mxu0
  %v563 = vadd.f32 0.0, %v562
  %v564 = vpop.f32.mrb[0].mxu0
  %565 = vmatprep.mubr.f32.mxu0 0.0
  %566 = vmatmul.mubr.f32.gmra.mrb[0].mxu0 %v446
  %v567 = vpop.f32.mrb[0].mxu0
  %v568 = vadd.f32 0.0, %v567
  %v569 = vpop.f32.mrb[0].mxu0
  %570 = vmatprep.mubr.f32.mxu0 0.0
  %571 = vmatmul.mubr.f32.gmra.mrb[0].mxu0 %v449
  %v572 = vpop.f32.mrb[0].mxu0
  %v573 = vadd.f32 0.0, %v572
  %v574 = vpop.f32.mrb[0].mxu0
  %575 = vmatprep.mubr.f32.mxu0 0.0
  %576 = vmatmul.mubr.f32.gmra.mrb[0].mxu0 %v452
  %v577 = vpop.f32.mrb[0].mxu0
  %v578 = vadd.f32 0.0, %v577
  %v579 = vpop.f32.mrb[0].mxu0
  %580 = vmatprep.mubr.f32.mxu0 0.0
  %581 = vmatmul.mubr.f32.gmra.mrb[0].mxu0 %v455
  %v582 = vpop.f32.mrb[0].mxu0
  %v583 = vadd.f32 0.0, %v582
  %v584 = vpop.f32.mrb[0].mxu0
  %585 = vmatprep.mubr.f32.mxu0 0.0
  %586 = vmatmul.mubr.f32.gmra.mrb[0].mxu0 %v458
  %v587 = vpop.f32.mrb[0].mxu0
  %v588 = vadd.f32 0.0, %v587
  %v589 = vpop.f32.mrb[0].mxu0
  %590 = vmatprep.mubr.f32.mxu0 0.0
  %591 = vmatmul.mubr.f32.gmra.mrb[0].mxu0 %v461
  %v592 = vpop.f32.mrb[0].mxu0
  %v593 = vadd.f32 0.0, %v592
  %v594 = vpop.f32.mrb[0].mxu0
  %595 = vmatprep.mubr.f32.mxu0 0.0
  %596 = vmatmul.mubr.f32.gmra.mrb[0].mxu0 %v464
  %v597 = vpop.f32.mrb[0].mxu0
  %v598 = vadd.f32 0.0, %v597
  %v599 = vpop.f32.mrb[0].mxu0
  %600 = vmatprep.mubr.f32.mxu0 0.0
  %601 = vmatmul.mubr.f32.gmra.mrb[0].mxu0 %v467
  %v602 = vpop.f32.mrb[0].mxu0
  %v603 = vadd.f32 0.0, %v602
  %v604 = vpop.f32.mrb[0].mxu0
  %605 = vmatprep.mubr.f32.mxu0 0.0
  %606 = vmatmul.mubr.f32.gmra.mrb[0].mxu0 %v470
  %v607 = vpop.f32.mrb[0].mxu0
  %v608 = vadd.f32 0.0, %v607
  %v609 = vpop.f32.mrb[0].mxu0
  %610 = vmatprep.mubr.f32.mxu0 0.0
  %611 = vmatmul.mubr.f32.gmra.mrb[0].mxu0 %v473
  %v612 = vpop.f32.mrb[0].mxu0
  %v613 = vadd.f32 0.0, %v612
  %v614 = vpop.f32.mrb[0].mxu0
  %615 = vmatprep.mubr.f32.mxu0 0.0
  %616 = vmatmul.mubr.f32.gmra.mrb[0].mxu0 %v476
  %v617 = vpop.f32.mrb[0].mxu0
  %v618 = vadd.f32 0.0, %v617
  %v619 = vpop.f32.mrb[0].mxu0
  %620 = vmatprep.mubr.f32.mxu0 0.0
  %621 = vmatmul.mubr.f32.gmra.mrb[0].mxu0 %v479
  %v622 = vpop.f32.mrb[0].mxu0
  %v623 = vadd.f32 0.0, %v622
  %v624 = vpop.f32.mrb[0].mxu0
  %625 = vdwg.mxu0
  %v626 = vmul.f32 %v339, %v339
  %v627 = vmul.f32 %v344, %v344
  %v628 = vmul.f32 %v349, %v349
  %v629 = vmul.f32 %v354, %v354
  %v630 = vmul.f32 %v359, %v359
  %v631 = vmul.f32 %v364, %v364
  %v632 = vmul.f32 %v369, %v369
  %v633 = vmul.f32 %v374, %v374
  %v634 = vmul.f32 %v379, %v379
  %v635 = vmul.f32 %v384, %v384
  %v636 = vmul.f32 %v389, %v389
  %v637 = vmul.f32 %v394, %v394
  %v638 = vmul.f32 %v399, %v399
  %v639 = vmul.f32 %v404, %v404
  %v640 = vmul.f32 %v409, %v409
  %v641 = vmul.f32 %v414, %v414
  %v642 = vsub.f32 %v548, %v626
  %v643 = vsub.f32 %v553, %v627
  %v644 = vsub.f32 %v558, %v628
  %v645 = vsub.f32 %v563, %v629
  %v646 = vsub.f32 %v568, %v630
  %v647 = vsub.f32 %v573, %v631
  %v648 = vsub.f32 %v578, %v632
  %v649 = vsub.f32 %v583, %v633
  %v650 = vsub.f32 %v588, %v634
  %v651 = vsub.f32 %v593, %v635
  %v652 = vsub.f32 %v598, %v636
  %v653 = vsub.f32 %v603, %v637
  %v654 = vsub.f32 %v608, %v638
  %v655 = vsub.f32 %v613, %v639
  %v656 = vsub.f32 %v618, %v640
  %v657 = vsub.f32 %v623, %v641
  %v658 = vmax.f32 %v642, 0.0
  %v659 = vmax.f32 %v643, 0.0
  %v660 = vmax.f32 %v644, 0.0
  %v661 = vmax.f32 %v645, 0.0
  %v662 = vmax.f32 %v646, 0.0
  %v663 = vmax.f32 %v647, 0.0
  %v664 = vmax.f32 %v648, 0.0
  %v665 = vmax.f32 %v649, 0.0
  %v666 = vmax.f32 %v650, 0.0
  %v667 = vmax.f32 %v651, 0.0
  %v668 = vmax.f32 %v652, 0.0
  %v669 = vmax.f32 %v653, 0.0
  %v670 = vmax.f32 %v654, 0.0
  %v671 = vmax.f32 %v655, 0.0
  %v672 = vmax.f32 %v656, 0.0
  %v673 = vmax.f32 %v657, 0.0
  %v674 = vsub.f32 %v153, %v339
  %v675 = vsub.f32 %v156, %v344
  %v676 = vsub.f32 %v161, %v349
  %v677 = vsub.f32 %v164, %v354
  %v678 = vsub.f32 %v169, %v359
  %v679 = vsub.f32 %v172, %v364
  %v680 = vsub.f32 %v177, %v369
  %v681 = vsub.f32 %v180, %v374
  %v682 = vsub.f32 %v185, %v379
  %v683 = vsub.f32 %v188, %v384
  %v684 = vsub.f32 %v193, %v389
  %v685 = vsub.f32 %v196, %v394
  %v686 = vsub.f32 %v201, %v399
  %v687 = vsub.f32 %v204, %v404
  %v688 = vsub.f32 %v209, %v409
  %v689 = vsub.f32 %v212, %v414
  %v690 = vadd.f32 %v658, 1e-05
  %v691 = vadd.f32 %v659, 1e-05
  %v692 = vadd.f32 %v660, 1e-05
  %v693 = vadd.f32 %v661, 1e-05
  %v694 = vadd.f32 %v662, 1e-05
  %v695 = vadd.f32 %v663, 1e-05
  %v696 = vadd.f32 %v664, 1e-05
  %v697 = vadd.f32 %v665, 1e-05
  %v698 = vadd.f32 %v666, 1e-05
  %v699 = vadd.f32 %v667, 1e-05
  %v700 = vadd.f32 %v668, 1e-05
  %v701 = vadd.f32 %v669, 1e-05
  %v702 = vadd.f32 %v670, 1e-05
  %v703 = vadd.f32 %v671, 1e-05
  %v704 = vadd.f32 %v672, 1e-05
  %v705 = vadd.f32 %v673, 1e-05
  %v706 = vrsqrt.pop %v690
  %v707 = vrsqrt.pop %v691
  %v708 = vrsqrt.pop %v692
  %v709 = vrsqrt.pop %v693
  %v710 = vrsqrt.pop %v694
  %v711 = vrsqrt.pop %v695
  %v712 = vrsqrt.pop %v696
  %v713 = vrsqrt.pop %v697
  %v714 = vrsqrt.pop %v698
  %v715 = vrsqrt.pop %v699
  %v716 = vrsqrt.pop %v700
  %v717 = vrsqrt.pop %v701
  %v718 = vrsqrt.pop %v702
  %v719 = vrsqrt.pop %v703
  %v720 = vrsqrt.pop %v704
  %v721 = vrsqrt.pop %v705
  %v722 = vmul.f32 %v674, %v706
  %v723 = vmul.f32 %v675, %v707
  %v724 = vmul.f32 %v676, %v708
  %v725 = vmul.f32 %v677, %v709
  %v726 = vmul.f32 %v678, %v710
  %v727 = vmul.f32 %v679, %v711
  %v728 = vmul.f32 %v680, %v712
  %v729 = vmul.f32 %v681, %v713
  %v730 = vmul.f32 %v682, %v714
  %v731 = vmul.f32 %v683, %v715
  %v732 = vmul.f32 %v684, %v716
  %v733 = vmul.f32 %v685, %v717
  %v734 = vmul.f32 %v686, %v718
  %v735 = vmul.f32 %v687, %v719
  %v736 = vmul.f32 %v688, %v720
  %v737 = vmul.f32 %v689, %v721
  %v738 = vld [vmem:[%s3] sm:$0x1]
  %v740 = vlaneseq
  %v741 = vshrl.u32 %v740, 7
  %v742 = vsub.s32 0, %v741
  %v743 = vrot.slane %v738, %v742
  %v745 = vmul.f32 %v722, %v743
  %v746 = vmul.f32 %v723, %v743
  %v747 = vmul.f32 %v724, %v743
  %v748 = vmul.f32 %v725, %v743
  %v749 = vmul.f32 %v726, %v743
  %v750 = vmul.f32 %v727, %v743
  %v751 = vmul.f32 %v728, %v743
  %v752 = vmul.f32 %v729, %v743
  %v753 = vmul.f32 %v730, %v743
  %v754 = vmul.f32 %v731, %v743
  %v755 = vmul.f32 %v732, %v743
  %v756 = vmul.f32 %v733, %v743
  %v757 = vmul.f32 %v734, %v743
  %v758 = vmul.f32 %v735, %v743
  %v759 = vmul.f32 %v736, %v743
  %v760 = vmul.f32 %v737, %v743
  %v761 = vld [vmem:[%s4] sm:$0x1]
  %v763 = vlaneseq
  %v764 = vshrl.u32 %v763, 7
  %v765 = vsub.s32 0, %v764
  %v766 = vrot.slane %v761, %v765
  %v768 = vadd.f32 %v745, %v766
  %v769 = vadd.f32 %v746, %v766
  %v770 = vadd.f32 %v747, %v766
  %v771 = vadd.f32 %v748, %v766
  %v772 = vadd.f32 %v749, %v766
  %v773 = vadd.f32 %v750, %v766
  %v774 = vadd.f32 %v751, %v766
  %v775 = vadd.f32 %v752, %v766
  %v776 = vadd.f32 %v753, %v766
  %v777 = vadd.f32 %v754, %v766
  %v778 = vadd.f32 %v755, %v766
  %v779 = vadd.f32 %v756, %v766
  %v780 = vadd.f32 %v757, %v766
  %v781 = vadd.f32 %v758, %v766
  %v782 = vadd.f32 %v759, %v766
  %v783 = vadd.f32 %v760, %v766
  %784 = vst.msk [vmem:[%s5] sm:$0xff] %vm93, %v768
  %785 = vst.msk [vmem:[%s5 + $0x10] sm:$0xff] %vm93, %v769
  %786 = vst.msk [vmem:[%s5 + $0x20] sm:$0xff] %vm93, %v770
  %787 = vst.msk [vmem:[%s5 + $0x30] sm:$0xff] %vm93, %v771
  %788 = vst.msk [vmem:[%s5 + $0x40] sm:$0xff] %vm93, %v772
  %789 = vst.msk [vmem:[%s5 + $0x50] sm:$0xff] %vm93, %v773
  %790 = vst.msk [vmem:[%s5 + $0x60] sm:$0xff] %vm93, %v774
  %791 = vst.msk [vmem:[%s5 + $0x70] sm:$0xff] %vm93, %v775
  %792 = vst.msk [vmem:[%s5 + $0x80] sm:$0xff] %vm93, %v776
  %793 = vst.msk [vmem:[%s5 + $0x90] sm:$0xff] %vm93, %v777
  %794 = vst.msk [vmem:[%s5 + $0xa0] sm:$0xff] %vm93, %v778
  %795 = vst.msk [vmem:[%s5 + $0xb0] sm:$0xff] %vm93, %v779
  %796 = vst.msk [vmem:[%s5 + $0xc0] sm:$0xff] %vm93, %v780
  %797 = vst.msk [vmem:[%s5 + $0xd0] sm:$0xff] %vm93, %v781
  %798 = vst.msk [vmem:[%s5 + $0xe0] sm:$0xff] %vm93, %v782
  %799 = vst.msk [vmem:[%s5 + $0xf0] sm:$0xff] %vm93, %v783
  %816 = vrot.lane.b32.xlu0 %v768, 96
  %v817 = vpop.permute.xlu0 %816
  %818 = vrot.lane.b32.xlu0 %v769, 96
  %v819 = vpop.permute.xlu0 %818
  %820 = vrot.lane.b32.xlu0 %v770, 96
  %v821 = vpop.permute.xlu0 %820
  %822 = vrot.lane.b32.xlu0 %v771, 96
  %v823 = vpop.permute.xlu0 %822
  %824 = vrot.lane.b32.xlu0 %v772, 96
  %v825 = vpop.permute.xlu0 %824
  %826 = vrot.lane.b32.xlu0 %v773, 96
  %v827 = vpop.permute.xlu0 %826
  %828 = vrot.lane.b32.xlu0 %v774, 96
  %v829 = vpop.permute.xlu0 %828
  %830 = vrot.lane.b32.xlu0 %v775, 96
  %v831 = vpop.permute.xlu0 %830
  %832 = vrot.lane.b32.xlu0 %v776, 96
  %v833 = vpop.permute.xlu0 %832
  %834 = vrot.lane.b32.xlu0 %v777, 96
  %v835 = vpop.permute.xlu0 %834
  %836 = vrot.lane.b32.xlu0 %v778, 96
  %v837 = vpop.permute.xlu0 %836
  %838 = vrot.lane.b32.xlu0 %v779, 96
  %v839 = vpop.permute.xlu0 %838
  %840 = vrot.lane.b32.xlu0 %v780, 96
  %v841 = vpop.permute.xlu0 %840
  %842 = vrot.lane.b32.xlu0 %v781, 96
  %v843 = vpop.permute.xlu0 %842
  %844 = vrot.lane.b32.xlu0 %v782, 96
  %v845 = vpop.permute.xlu0 %844
  %846 = vrot.lane.b32.xlu0 %v783, 96
  %v847 = vpop.permute.xlu0 %846
  %864 = vst.msk [vmem:[%s5 + $0x8] sm:$0xff] %vm93, %v817
  %865 = vst.msk [vmem:[%s5 + $0x18] sm:$0xff] %vm93, %v819
  %866 = vst.msk [vmem:[%s5 + $0x28] sm:$0xff] %vm93, %v821
  %867 = vst.msk [vmem:[%s5 + $0x38] sm:$0xff] %vm93, %v823
  %868 = vst.msk [vmem:[%s5 + $0x48] sm:$0xff] %vm93, %v825
  %869 = vst.msk [vmem:[%s5 + $0x58] sm:$0xff] %vm93, %v827
  %870 = vst.msk [vmem:[%s5 + $0x68] sm:$0xff] %vm93, %v829
  %871 = vst.msk [vmem:[%s5 + $0x78] sm:$0xff] %vm93, %v831
  %872 = vst.msk [vmem:[%s5 + $0x88] sm:$0xff] %vm93, %v833
  %873 = vst.msk [vmem:[%s5 + $0x98] sm:$0xff] %vm93, %v835
  %874 = vst.msk [vmem:[%s5 + $0xa8] sm:$0xff] %vm93, %v837
  %875 = vst.msk [vmem:[%s5 + $0xb8] sm:$0xff] %vm93, %v839
  %876 = vst.msk [vmem:[%s5 + $0xc8] sm:$0xff] %vm93, %v841
  %877 = vst.msk [vmem:[%s5 + $0xd8] sm:$0xff] %vm93, %v843
  %878 = vst.msk [vmem:[%s5 + $0xe8] sm:$0xff] %vm93, %v845
  %879 = vst.msk [vmem:[%s5 + $0xf8] sm:$0xff] %vm93, %v847
  // Predicated region
  $region22: #{_lambda_.1} parent=0 // pred_check
    _
  $region23: #{_lambda_.1} parent=0 // pred_check_branch
    %881 = sbr.rel (0) target = $region25
  $region24: #{_lambda_.1} parent=0 // pred_region
    _
  $region25: #{_lambda_.1} parent=0 // pred_fallthru
    _
  // Predicated region
  $region26: #{_lambda_.1} parent=0 // pred_check
    _
  $region27: #{_lambda_.1} parent=0 // pred_check_branch
    %883 = sbr.rel (0) target = $region29
  $region28: #{_lambda_.1} parent=0 // pred_region
    _
  $region29: #{_lambda_.1} parent=0 // pred_fallthru
    _

</llo_original>
